<compile_context>
chip_gen: v7x
topology: tpu7x:2x2x1
jax: 0.10.0
libtpu: 0.0.40
codegen_flags: <defaults>
</compile_context>

<pallas_src>
import functools

import jax
import jax.numpy as jnp
from jax import lax
from jax.experimental import pallas as pl
from jax.experimental.pallas import tpu as pltpu


# ----------------------------------------------------------------------------
# Tiling helpers
# ----------------------------------------------------------------------------
_LANE = 128          # lane quantum (last dim)
_SUBLANE = 8         # sublane quantum (second-to-last dim)
_TM, _TN, _TK = 256, 256, 512            # default tiles (f32-safe on v5e/v6e/v7x)
_VMEM_LIMIT_BYTES = 48 * 1024 * 1024     # < 64 MiB (v7x physical), << 128 MiB (v5e/v6e)


def _round_up(x, m):
    return (x + m - 1) // m * m


def _plan_dim(d, tile, quantum):
    """Pick an effective tile (multiple of `quantum`) and the padded extent."""
    eff = min(tile, _round_up(d, quantum))
    return eff, _round_up(d, eff)


def _pair(v):
    if isinstance(v, (tuple, list)):
        return int(v[0]), int(v[-1])
    return int(v), int(v)


# ----------------------------------------------------------------------------
# Pallas kernel 1: tiled  y = x @ w + b   (w already K-major, bias f32)
# ----------------------------------------------------------------------------
def _matmul_bias_kernel(x_ref, w_ref, b_ref, o_ref, acc_ref):
    k = pl.program_id(2)

    @pl.when(k == 0)
    def _init():
        acc_ref[...] = jnp.zeros_like(acc_ref)

    acc_ref[...] += jnp.dot(x_ref[...], w_ref[...],
                            preferred_element_type=jnp.float32)

    @pl.when(k == pl.num_programs(2) - 1)
    def _finalize():
        # bias added in f32, single final cast to the output dtype
        o_ref[...] = (acc_ref[...] + b_ref[...]).astype(o_ref.dtype)


def _matmul_bias_padded(x_pad, w_pad, b_pad, tm, tn, tk):
    """x_pad: (Mp, Kp), w_pad: (Kp, Np) K-major, b_pad: (1, Np) f32 -> (Mp, Np)."""
    Mp, Kp = x_pad.shape
    Np = w_pad.shape[1]
    grid = (Mp // tm, Np // tn, Kp // tk)
    itemsize = jnp.dtype(x_pad.dtype).itemsize
    cost = pl.CostEstimate(
        flops=2 * Mp * Np * Kp,
        transcendentals=0,
        bytes_accessed=(Mp * Kp + Kp * Np + Mp * Np) * itemsize + Np * 4,
    )
    return pl.pallas_call(
        _matmul_bias_kernel,
        out_shape=jax.ShapeDtypeStruct((Mp, Np), x_pad.dtype),
        grid=grid,
        in_specs=[
            pl.BlockSpec((tm, tk), lambda i, j, k: (i, k)),
            pl.BlockSpec((tk, tn), lambda i, j, k: (k, j)),
            pl.BlockSpec((1, tn), lambda i, j, k: (0, j)),
        ],
        out_specs=pl.BlockSpec((tm, tn), lambda i, j, k: (i, j)),
        scratch_shapes=[pltpu.VMEM((tm, tn), jnp.float32)],
        compiler_params=pltpu.CompilerParams(
            dimension_semantics=("parallel", "parallel", "arbitrary"),
            vmem_limit_bytes=_VMEM_LIMIT_BYTES,
        ),
        cost_estimate=cost,
    )(x_pad, w_pad, b_pad)


def _prepare_linear(weight, bias):
    """One-time (init-time) weight/bias prep: transpose to K-major + pad lane-dense."""
    N, K = weight.shape
    tk, Kp = _plan_dim(K, _TK, _LANE)
    tn, Np = _plan_dim(N, _TN, _LANE)
    w_kn = jnp.transpose(weight)                               # (K, N)
    w_pad = jnp.pad(w_kn, ((0, Kp - K), (0, Np - N)))
    if bias is None:
        b_pad = jnp.zeros((1, Np), jnp.float32)
    else:
        b_pad = jnp.pad(jnp.asarray(bias, jnp.float32).reshape(1, N),
                        ((0, 0), (0, Np - N)))
    return w_pad, b_pad, (K, N, Kp, Np, tk, tn)


def _linear_prepared(x, w_pad, b_pad, meta):
    K, N, Kp, Np, tk, tn = meta
    lead = x.shape[:-1]
    x2 = x.reshape(-1, K)
    M = x2.shape[0]
    tm, Mp = _plan_dim(M, _TM, _SUBLANE)
    x_pad = jnp.pad(x2, ((0, Mp - M), (0, Kp - K)))
    w_use = w_pad if w_pad.dtype == x2.dtype else w_pad.astype(x2.dtype)
    y = _matmul_bias_padded(x_pad, w_use, b_pad, tm, tn, tk)
    return y[:M, :N].reshape(*lead, N)


def pallas_linear(x, weight, bias=None):
    """F.linear semantics: x (..., in), weight (out, in), bias (out,)."""
    w_pad, b_pad, meta = _prepare_linear(weight, bias)
    return _linear_prepared(x, w_pad, b_pad, meta)


# ----------------------------------------------------------------------------
# Pallas kernel 2: fused im2col conv2d (NHWC in VMEM, lane-dense Cout)
# ----------------------------------------------------------------------------
def _conv2d_kernel(x_ref, w_ref, b_ref, o_ref, *, KH, KW, Ho, Wo, sh, sw, dh, dw):
    # x_ref: (1, Hp, Wp, Cin) padded image for this batch element
    # w_ref: (KH, KW, Cin, Cout_pad)   b_ref: (1, Cout_pad) f32
    # o_ref: (1, Ho*Wo, Cout_pad)
    cin = x_ref.shape[-1]
    cp = o_ref.shape[-1]
    acc = jnp.zeros((Ho * Wo, cp), jnp.float32)
    for ki in range(KH):
        for kj in range(KW):
            hi, wj = ki * dh, kj * dw
            win = x_ref[0, hi:hi + (Ho - 1) * sh + 1,
                        wj:wj + (Wo - 1) * sw + 1, :]          # (≥Ho, ≥Wo, Cin)
            if sh > 1 or sw > 1:
                # TODO(synk): strided conv subsamples the loaded window in-register;
                # a strided-DMA index_map would avoid loading the skipped rows.
                win = win[::sh, ::sw, :]
            patch = win.reshape(Ho * Wo, cin)                  # in-VMEM im2col
            acc = acc + jnp.dot(patch, w_ref[ki, kj],
                                preferred_element_type=jnp.float32)
    acc = acc + b_ref[...]                                     # bias in f32
    o_ref[0] = acc.astype(o_ref.dtype)


def _prepare_conv2d(weight, bias):
    """One-time weight/bias prep: OIHW -> (KH,KW,Cin,Cout_pad), Cout padded to 128."""
    Cout, Cin, KH, KW = weight.shape
    Cp = _round_up(Cout, _LANE)
    w_khwc = jnp.transpose(weight, (2, 3, 1, 0))               # (KH, KW, Cin, Cout)
    w_pad = jnp.pad(w_khwc, ((0, 0), (0, 0), (0, 0), (0, Cp - Cout)))
    if bias is None:
        b_pad = jnp.zeros((1, Cp), jnp.float32)
    else:
        b_pad = jnp.pad(jnp.asarray(bias, jnp.float32).reshape(1, Cout),
                        ((0, 0), (0, Cp - Cout)))
    return w_pad, b_pad, (Cout, Cin, KH, KW, Cp)


def _conv2d_prepared(x_nchw, w_pad, b_pad, meta, stride, padding, dilation, groups):
    if groups != 1:
        # TODO(synk): grouped conv org_modules are not wired to the fused Pallas kernel.
        raise NotImplementedError("groups != 1 is not supported by the Pallas conv2d kernel")
    Cout, Cin, KH, KW, Cp = meta
    sh, sw = _pair(stride)
    ph, pw = _pair(padding)
    dh, dw = _pair(dilation)
    N, Cin_x, H, W = x_nchw.shape
    assert Cin_x == Cin, "input channel mismatch"

    # Glue at the API boundary: NCHW -> NHWC (channels-last = lane dim) + spatial
    # zero pad.  The im2col itself happens inside the kernel in VMEM.
    x_nhwc = jnp.transpose(x_nchw, (0, 2, 3, 1))
    xp = jnp.pad(x_nhwc, ((0, 0), (ph, ph), (pw, pw), (0, 0)))
    Hp, Wp = H + 2 * ph, W + 2 * pw
    Ho = (Hp - dh * (KH - 1) - 1) // sh + 1
    Wo = (Wp - dw * (KW - 1) - 1) // sw + 1

    kernel = functools.partial(_conv2d_kernel, KH=KH, KW=KW, Ho=Ho, Wo=Wo,
                               sh=sh, sw=sw, dh=dh, dw=dw)
    itemsize = jnp.dtype(x_nchw.dtype).itemsize
    cost = pl.CostEstimate(
        flops=2 * N * Ho * Wo * Cp * Cin * KH * KW,
        transcendentals=0,
        bytes_accessed=(xp.size + w_pad.size + N * Ho * Wo * Cp) * itemsize,
    )
    w_use = w_pad if w_pad.dtype == x_nchw.dtype else w_pad.astype(x_nchw.dtype)
    y = pl.pallas_call(
        kernel,
        out_shape=jax.ShapeDtypeStruct((N, Ho * Wo, Cp), x_nchw.dtype),
        grid=(N,),
        in_specs=[
            pl.BlockSpec((1, Hp, Wp, Cin), lambda n: (n, 0, 0, 0)),
            pl.BlockSpec((KH, KW, Cin, Cp), lambda n: (0, 0, 0, 0)),
            pl.BlockSpec((1, Cp), lambda n: (0, 0)),
        ],
        out_specs=pl.BlockSpec((1, Ho * Wo, Cp), lambda n: (n, 0, 0)),
        compiler_params=pltpu.CompilerParams(
            dimension_semantics=("parallel",),
            vmem_limit_bytes=_VMEM_LIMIT_BYTES,
        ),
        cost_estimate=cost,
    )(xp, w_use, b_pad)

    # Lane-dense NHWC result from the kernel; slice padded channels and restore
    # NCHW to preserve F.conv2d semantics.
    # TODO(synk): callers that can consume channels-last outputs could skip this transpose.
    y = y.reshape(N, Ho, Wo, Cp)[..., :Cout]
    return jnp.transpose(y, (0, 3, 1, 2))


def pallas_conv2d(x, weight, bias=None, stride=1, padding=0, dilation=1, groups=1):
    """F.conv2d semantics for NCHW / OIHW (groups==1)."""
    w_pad, b_pad, meta = _prepare_conv2d(weight, bias)
    return _conv2d_prepared(x, w_pad, b_pad, meta, stride, padding, dilation, groups)


# ----------------------------------------------------------------------------
# Minimal "org_module" stand-ins (nn.Linear / nn.Conv2d equivalents).
# Weight prep (cast / transpose / pad) is hoisted here, off the hot path.
# ----------------------------------------------------------------------------
class PallasLinear:
    def __init__(self, weight, bias=None):
        self.out_features, self.in_features = weight.shape
        self.weight = weight
        self.bias = bias
        self._w_pad, self._b_pad, self._meta = _prepare_linear(weight, bias)

    def forward(self, x):
        return _linear_prepared(x, self._w_pad, self._b_pad, self._meta)


class PallasConv2d:
    def __init__(self, weight, bias=None, stride=1, padding=0, dilation=1, groups=1):
        self.out_channels, in_per_group, kh, kw = weight.shape
        self.in_channels = in_per_group * groups
        self.kernel_size = (kh, kw)
        self.weight = weight
        self.bias = bias
        self.stride = stride
        self.padding = padding
        self.dilation = dilation
        self.groups = groups
        self._w_pad, self._b_pad, self._meta = _prepare_conv2d(weight, bias)

    def forward(self, x):
        return _conv2d_prepared(x, self._w_pad, self._b_pad, self._meta,
                                self.stride, self.padding, self.dilation, self.groups)


# ----------------------------------------------------------------------------
# LycorisBaseModule mirror (JAX / Pallas)
# ----------------------------------------------------------------------------
class LycorisBaseModule:
    def __init__(self, lora_name, org_module, multiplier=1.0, dropout=0.0,
                 rank_dropout=0.0, module_dropout=0.0, rank_dropout_scale=False,
                 bypass_mode=None, **kwargs):
        self.lora_name = lora_name
        self.not_supported = False
        self.module = type(org_module)

        if isinstance(org_module, PallasLinear):
            self.module_type = "linear"
            self.shape = (org_module.out_features, org_module.in_features)
            self.op = pallas_linear
            self.dim = org_module.out_features
            self.kw_dict = {}
        elif isinstance(org_module, PallasConv2d):
            self.module_type = "conv2d"
            self.shape = (org_module.out_channels, org_module.in_channels,
                          *org_module.kernel_size)
            self.op = pallas_conv2d
            self.dim = org_module.out_channels
            self.kw_dict = {"stride": org_module.stride,
                            "padding": org_module.padding,
                            "dilation": org_module.dilation,
                            "groups": org_module.groups}
        else:
            # TODO(synk): conv1d/conv3d/layernorm/groupnorm org_modules not wired to Pallas kernels here.
            self.not_supported = True
            self.module_type = "unknown"

        self.dtype_tensor = jnp.asarray(0.0, jnp.float32)
        self.is_quant = False  # TODO(synk): a v7x quant path would need fp8 (e4m3) weights, not int8.
        self.bypass_mode = bypass_mode
        self.dropout = dropout
        self.rank_dropout = rank_dropout
        self.rank_dropout_scale = rank_dropout_scale
        self.module_dropout = module_dropout
        self.multiplier = multiplier
        self.org_forward = org_module.forward
        self.org_module = [org_module]

    @property
    def dtype(self):
        return self.dtype_tensor.dtype

    @property
    def org_weight(self):
        return self.org_module[0].weight

    def apply_to(self, **kwargs):
        if self.not_supported:
            return
        self.org_forward = self.org_module[0].forward

    def restore(self):
        if self.not_supported:
            return

    def forward(self, *args, **kwargs):
        # Exactly mirrors the PyTorch base class: the base module has no forward.
        raise NotImplementedError


# ----------------------------------------------------------------------------
# main
# ----------------------------------------------------------------------------
if __name__ == "__main__":
    key = jax.random.PRNGKey(0)
    k1, k2, k3, k4, k5, k6, k7, k8, k9 = jax.random.split(key, 9)

    # ---- linear org_module: batch=8, in_features=32, out_features=32 ----
    x_lin = jax.random.normal(k1, (8, 32), dtype=jnp.float32)
    w_lin = jax.random.normal(k2, (32, 32), dtype=jnp.float32) * 0.1
    b_lin = jax.random.normal(k3, (32,), dtype=jnp.float32) * 0.1
    lin_mod = LycorisBaseModule("lora_lin", PallasLinear(w_lin, b_lin), multiplier=1.0)
    assert lin_mod.module_type == "linear" and lin_mod.shape == (32, 32)

    y_lin = jax.block_until_ready(lin_mod.org_forward(x_lin))
    y_lin_ref = x_lin @ w_lin.T + b_lin
    assert y_lin.shape == (8, 32)
    assert jnp.allclose(y_lin, y_lin_ref, atol=1e-4, rtol=1e-4)

    # ---- larger linear: exercises the tiled (M,N,K) grid + K accumulation ----
    x_big = jax.random.normal(k7, (64, 1024), dtype=jnp.float32)
    w_big = jax.random.normal(k8, (512, 1024), dtype=jnp.float32) * 0.05
    b_big = jax.random.normal(k9, (512,), dtype=jnp.float32) * 0.1
    y_big = jax.block_until_ready(pallas_linear(x_big, w_big, b_big))
    y_big_ref = jnp.dot(x_big, w_big.T, precision=lax.Precision.HIGHEST) + b_big
    assert y_big.shape == (64, 512)
    assert jnp.allclose(y_big, y_big_ref, atol=1e-2, rtol=1e-2)

    # ---- conv2d org_module: x NCHW (2, 4, 16, 16), weight (8, 4, 3, 3), pad=1 ----
    x_conv = jax.random.normal(k4, (2, 4, 16, 16), dtype=jnp.float32)
    w_conv = jax.random.normal(k5, (8, 4, 3, 3), dtype=jnp.float32) * 0.1
    b_conv = jax.random.normal(k6, (8,), dtype=jnp.float32) * 0.1
    conv_mod = LycorisBaseModule(
        "lora_conv", PallasConv2d(w_conv, b_conv, stride=1, padding=1), multiplier=1.0)
    assert conv_mod.module_type == "conv2d" and conv_mod.shape == (8, 4, 3, 3)

    y_conv = jax.block_until_ready(conv_mod.org_forward(x_conv))
    y_conv_ref = lax.conv_general_dilated(
        x_conv, w_conv, window_strides=(1, 1), padding=((1, 1), (1, 1)),
        dimension_numbers=("NCHW", "OIHW", "NCHW"),
    ) + b_conv.reshape(1, 8, 1, 1)
    assert y_conv.shape == (2, 8, 16, 16)
    assert jnp.allclose(y_conv, y_conv_ref, atol=1e-4, rtol=1e-4)

    # base-class forward is (by design) NotImplemented, same as PyTorch
    try:
        lin_mod.forward(x_lin)
        raise AssertionError("base forward should raise NotImplementedError")
    except NotImplementedError:
        pass

    print("KERNEL_OK")
</pallas_src>

<mosaic_0001>
module attributes {stable_mosaic.version = 11 : i64} {
  func.func @_matmul_bias_kernel(%arg0: i32, %arg1: i32, %arg2: i32, %arg3: memref<8x128xf32, #tpu.memory_space<vmem>>, %arg4: memref<128x128xf32, #tpu.memory_space<vmem>>, %arg5: memref<1x128xf32, #tpu.memory_space<vmem>>, %arg6: memref<8x128xf32, #tpu.memory_space<vmem>>, %arg7: memref<8x128xf32, #tpu.memory_space<vmem>>) attributes {dimension_semantics = [#tpu.dimension_semantics<parallel>, #tpu.dimension_semantics<parallel>, #tpu.dimension_semantics<arbitrary>], iteration_bounds = array<i64: 1, 1, 1>, scalar_prefetch = 0 : i64, scratch_operands = 1 : i64, tpu.core_type = #tpu.core_type<tc>, window_params = [{transform_indices = @transform_0, window_bounds = array<i64: 8, 128>}, {transform_indices = @transform_1, window_bounds = array<i64: 128, 128>}, {transform_indices = @transform_2, window_bounds = array<i64: 1, 128>}, {transform_indices = @transform_3, window_bounds = array<i64: 8, 128>}]} {
    %c0_i32 = arith.constant 0 : i32
    %0 = arith.cmpi eq, %arg2, %c0_i32 : i32
    %1 = arith.extui %0 : i1 to i32
    %c0_i32_0 = arith.constant 0 : i32
    %2 = arith.cmpi ne, %1, %c0_i32_0 : i32
    scf.if %2 {
      %cst_10 = arith.constant 0.000000e+00 : f32
      %12 = vector.broadcast %cst_10 : f32 to vector<8x128xf32>
      %c0_11 = arith.constant 0 : index
      %c0_12 = arith.constant 0 : index
      %13 = vector.load %arg7[%c0_11, %c0_12] : memref<8x128xf32, #tpu.memory_space<vmem>>, vector<8x128xf32>
      tpu.vector_store %arg7[%c0_11, %c0_12], %12 {strides = array<i32>} : memref<8x128xf32, #tpu.memory_space<vmem>>, vector<8x128xf32>,
    } else {
    }
    %c0 = arith.constant 0 : index
    %c0_1 = arith.constant 0 : index
    %3 = vector.load %arg7[%c0, %c0_1] : memref<8x128xf32, #tpu.memory_space<vmem>>, vector<8x128xf32>
    %c0_2 = arith.constant 0 : index
    %c0_3 = arith.constant 0 : index
    %4 = vector.load %arg3[%c0_2, %c0_3] : memref<8x128xf32, #tpu.memory_space<vmem>>, vector<8x128xf32>
    %c0_4 = arith.constant 0 : index
    %c0_5 = arith.constant 0 : index
    %5 = vector.load %arg4[%c0_4, %c0_5] : memref<128x128xf32, #tpu.memory_space<vmem>>, vector<128x128xf32>
    %cst = arith.constant dense<0.000000e+00> : vector<8x128xf32>
    %6 = tpu.matmul %4, %5, %cst {dimension_numbers = #tpu.dot_dimension_numbers<[1], [0], [0], [1], [0, 0, 1, 1], [], []>} : vector<8x128xf32>, vector<128x128xf32>, vector<8x128xf32> -> vector<8x128xf32>
    %7 = arith.addf %3, %6 : vector<8x128xf32>
    %c0_6 = arith.constant 0 : index
    %c0_7 = arith.constant 0 : index
    %8 = vector.load %arg7[%c0_6, %c0_7] : memref<8x128xf32, #tpu.memory_space<vmem>>, vector<8x128xf32>
    tpu.vector_store %arg7[%c0_6, %c0_7], %7 {strides = array<i32>} : memref<8x128xf32, #tpu.memory_space<vmem>>, vector<8x128xf32>,
    %c0_i32_8 = arith.constant 0 : i32
    %9 = arith.cmpi eq, %arg2, %c0_i32_8 : i32
    %10 = arith.extui %9 : i1 to i32
    %c0_i32_9 = arith.constant 0 : i32
    %11 = arith.cmpi ne, %10, %c0_i32_9 : i32
    scf.if %11 {
      %c0_10 = arith.constant 0 : index
      %c0_11 = arith.constant 0 : index
      %12 = vector.load %arg7[%c0_10, %c0_11] : memref<8x128xf32, #tpu.memory_space<vmem>>, vector<8x128xf32>
      %c0_12 = arith.constant 0 : index
      %c0_13 = arith.constant 0 : index
      %13 = vector.load %arg5[%c0_12, %c0_13] : memref<1x128xf32, #tpu.memory_space<vmem>>, vector<1x128xf32>
      %14 = vector.broadcast %13 : vector<1x128xf32> to vector<8x128xf32>
      %15 = arith.addf %12, %14 : vector<8x128xf32>
      %c0_14 = arith.constant 0 : index
      %c0_15 = arith.constant 0 : index
      %16 = vector.load %arg6[%c0_14, %c0_15] : memref<8x128xf32, #tpu.memory_space<vmem>>, vector<8x128xf32>
      tpu.vector_store %arg6[%c0_14, %c0_15], %15 {strides = array<i32>} : memref<8x128xf32, #tpu.memory_space<vmem>>, vector<8x128xf32>,
    } else {
    }
    return
  }
  func.func @transform_0(%arg0: i32, %arg1: i32, %arg2: i32) -> (i32, i32) {
    %c0_i32 = arith.constant 0 : i32
    return %arg0, %arg2 : i32, i32
  }
  func.func @transform_1(%arg0: i32, %arg1: i32, %arg2: i32) -> (i32, i32) {
    %c0_i32 = arith.constant 0 : i32
    return %arg2, %arg1 : i32, i32
  }
  func.func @transform_2(%arg0: i32, %arg1: i32, %arg2: i32) -> (i32, i32) {
    %c0_i32 = arith.constant 0 : i32
    %c0_i32_0 = arith.constant 0 : i32
    return %c0_i32, %arg1 : i32, i32
  }
  func.func @transform_3(%arg0: i32, %arg1: i32, %arg2: i32) -> (i32, i32) {
    %c0_i32 = arith.constant 0 : i32
    return %arg0, %arg1 : i32, i32
  }
}

</mosaic_0001>

<llo_original>
// kernel: tpu_custom_call.1
$region0: #{tpu_custom_call.1}
  #allocation0 [shape = 'u32[]', space=smem, size = 0x4, offset = 0x4, fixed_abs, tag = 'smem constant byte address 0x4 - core index']
  #allocation1 [shape = 'u32[144,128]{1,0:T(1,128)}', space=vmem, size = 0x12000, scoped, tag = 'internal scratch']
  #allocation2 [shape = 'f32[8,128]{1,0:T(8,128)}', space=vmem, size = 0x1000, scoped, tag = 'scratch operand']
  %s0 = inlined_call_operand.hbm [shape: f32[8,128], index: 0, kind: input, shape index: {}]
  %s1 = inlined_call_operand.hbm [shape: f32[128,128], index: 1, kind: input, shape index: {}]
  %s2 = inlined_call_operand.vmem [shape: f32[1,128], index: 2, kind: input, shape index: {}]
  %s3 = inlined_call_operand.hbm [shape: f32[8,128], index: 3, kind: output, shape index: {}]
  %s4 = sld [smem:[#allocation0]]
  $region38: #{tpu_custom_call.1} parent=0
    _
  %s6 = ssub.s32 1, %s4
  %s7 = scalar_select 0, %s6, %s4
  $region1: #{tpu_custom_call.1} parent=0
    #allocation3 [shape = 'u8[4096]{0}', space=vmem, size = 0x1000, scoped, tag = 'input window, operand 0, single buffered']
    #allocation4 [shape = 's32[1]{0}', space=sflag, size = 0x4, scoped, tag = 'scoped memory for tpu_custom_call.1']
    #allocation5 [shape = 's32[1]{0}', space=sflag, size = 0x4, scoped, tag = 'scoped memory for tpu_custom_call.1']
    #allocation6 [shape = 'u8[65536]{0}', space=vmem, size = 0x10000, scoped, tag = 'input window, operand 1, single buffered']
    #allocation7 [shape = 's32[1]{0}', space=sflag, size = 0x4, scoped, tag = 'scoped memory for tpu_custom_call.1']
    #allocation8 [shape = 'u8[4096]{0}', space=vmem, size = 0x1000, scoped, tag = 'output window, operand 0, single buffered']
    %8 = vsyncpa [#allocation4], 0
    %9 = vsyncpa [#allocation7], 0
    %10 = vsyncpa [#allocation5], 0
    // Predicated region
    $region2: #{tpu_custom_call.1} parent=1 // pred_check
      _
    $region3: #{tpu_custom_call.1} parent=1 // pred_check_branch
      %12 = sbr.rel (0) target = $region5
    $region4: #{tpu_custom_call.1} parent=1 // pred_region
      %s14 = ssub.s32 128, 128
      %15 = vsyncadd [#allocation4], %s14
      %s17 = sshll.u32 [#allocation3], 4
      %s18 = int_to_ptr.vmem [resolvable:$true] %s17
      %20 = dma.hbm_to_vmem [thread:$0]  %s0, 128, %s18, [#allocation4]
    $region5: #{tpu_custom_call.1} parent=1 // pred_fallthru
      _
    // Predicated region
    $region6: #{tpu_custom_call.1} parent=1 // pred_check
      _
    $region7: #{tpu_custom_call.1} parent=1 // pred_check_branch
      %22 = sbr.rel (0) target = $region9
    $region8: #{tpu_custom_call.1} parent=1 // pred_region
      %s24 = ssub.s32 2048, 2048
      %25 = vsyncadd [#allocation7], %s24
      %s26 = sshll.u32 [#allocation6], 4
      %s27 = int_to_ptr.vmem [resolvable:$true] %s26
      %32 = dma.hbm_to_vmem [thread:$0]  %s1, 2048, %s27, [#allocation7], 128, 128, 8
    $region9: #{tpu_custom_call.1} parent=1 // pred_fallthru
      _
    // Predicated region
    $region10: #{tpu_custom_call.1} parent=1 // pred_check
      _
    $region11: #{tpu_custom_call.1} parent=1 // pred_check_branch
      %34 = sbr.rel (0) target = $region13
    $region12: #{tpu_custom_call.1} parent=1 // pred_region
      _
    $region13: #{tpu_custom_call.1} parent=1 // pred_fallthru
      _
    // Predicated region
    $region14: #{tpu_custom_call.1} parent=1 // pred_check
      _
    $region15: #{tpu_custom_call.1} parent=1 // pred_check_branch
      %36 = sbr.rel (0) target = $region17
    $region16: #{tpu_custom_call.1} parent=1 // pred_region
      %37 = dma.done [#allocation4], 128
    $region17: #{tpu_custom_call.1} parent=1 // pred_fallthru
      _
    // Predicated region
    $region18: #{tpu_custom_call.1} parent=1 // pred_check
      _
    $region19: #{tpu_custom_call.1} parent=1 // pred_check_branch
      %39 = sbr.rel (0) target = $region21
    $region20: #{tpu_custom_call.1} parent=1 // pred_region
      %40 = dma.done [#allocation7], 2048
    $region21: #{tpu_custom_call.1} parent=1 // pred_fallthru
      _
    %p41 = scmp.eq.s32.totalorder 0, 0
    // Predicated region
    $region22: #{tpu_custom_call.1} parent=1 // pred_check
      %p42 = pneg %p41
    $region23: #{tpu_custom_call.1} parent=1 // pred_check_branch
      %44 = sbr.rel (%p42) target = $region25
    $region24: #{tpu_custom_call.1} parent=1 // pred_region
      %45 = vst [vmem:[#allocation2] sm:$0xff] 0.0
    $region25: #{tpu_custom_call.1} parent=1 // pred_fallthru
      _
    %v46 = vld [vmem:[#allocation2] sm:$0xff]
    %v47 = vld [vmem:[#allocation3] sm:$0xff]
    %v48 = vld [vmem:[#allocation6] sm:$0xff]
    %v49 = vld [vmem:[#allocation6 + $0x8] sm:$0xff]
    %v50 = vld [vmem:[#allocation6 + $0x10] sm:$0xff]
    %v51 = vld [vmem:[#allocation6 + $0x18] sm:$0xff]
    %v52 = vld [vmem:[#allocation6 + $0x20] sm:$0xff]
    %v53 = vld [vmem:[#allocation6 + $0x28] sm:$0xff]
    %v54 = vld [vmem:[#allocation6 + $0x30] sm:$0xff]
    %v55 = vld [vmem:[#allocation6 + $0x38] sm:$0xff]
    %v56 = vld [vmem:[#allocation6 + $0x40] sm:$0xff]
    %v57 = vld [vmem:[#allocation6 + $0x48] sm:$0xff]
    %v58 = vld [vmem:[#allocation6 + $0x50] sm:$0xff]
    %v59 = vld [vmem:[#allocation6 + $0x58] sm:$0xff]
    %v60 = vld [vmem:[#allocation6 + $0x60] sm:$0xff]
    %v61 = vld [vmem:[#allocation6 + $0x68] sm:$0xff]
    %v62 = vld [vmem:[#allocation6 + $0x70] sm:$0xff]
    %v63 = vld [vmem:[#allocation6 + $0x78] sm:$0xff]
    %64 = vmatprep.subr.mxu0 0.0
    %65 = vmatpush1.msra.mxu0 %v48
    %66 = vmatprep.subr.mxu0 0.0
    %67 = vmatpush1.msra.mxu0 %v49
    %68 = vmatprep.subr.mxu0 0.0
    %69 = vmatpush1.msra.mxu0 %v50
    %70 = vmatprep.subr.mxu0 0.0
    %71 = vmatpush1.msra.mxu0 %v51
    %72 = vmatprep.subr.mxu0 0.0
    %73 = vmatpush1.msra.mxu0 %v52
    %74 = vmatprep.subr.mxu0 0.0
    %75 = vmatpush1.msra.mxu0 %v53
    %76 = vmatprep.subr.mxu0 0.0
    %77 = vmatpush1.msra.mxu0 %v54
    %78 = vmatprep.subr.mxu0 0.0
    %79 = vmatpush1.msra.mxu0 %v55
    %80 = vmatprep.subr.mxu0 0.0
    %81 = vmatpush1.msra.mxu0 %v56
    %82 = vmatprep.subr.mxu0 0.0
    %83 = vmatpush1.msra.mxu0 %v57
    %84 = vmatprep.subr.mxu0 0.0
    %85 = vmatpush1.msra.mxu0 %v58
    %86 = vmatprep.subr.mxu0 0.0
    %87 = vmatpush1.msra.mxu0 %v59
    %88 = vmatprep.subr.mxu0 0.0
    %89 = vmatpush1.msra.mxu0 %v60
    %90 = vmatprep.subr.mxu0 0.0
    %91 = vmatpush1.msra.mxu0 %v61
    %92 = vmatprep.subr.mxu0 0.0
    %93 = vmatpush1.msra.mxu0 %v62
    %94 = vmatprep.subr.mxu0 0.0
    %95 = vmatpush1.msra.mxu0 %v63
    %96 = vmatprep.subr.mxu0 0.0
    %97 = vmatpush1.msra.mxu0 0.0
    %98 = vmatprep.subr.mxu0 0.0
    %99 = vmatpush1.msra.mxu0 0.0
    %100 = vmatprep.subr.mxu0 0.0
    %101 = vmatpush1.msra.mxu0 0.0
    %102 = vmatprep.subr.mxu0 0.0
    %103 = vmatpush1.msra.mxu0 0.0
    %104 = vmatprep.subr.mxu0 0.0
    %105 = vmatpush1.msra.mxu0 0.0
    %106 = vmatprep.subr.mxu0 0.0
    %107 = vmatpush1.msra.mxu0 0.0
    %108 = vmatprep.subr.mxu0 0.0
    %109 = vmatpush1.msra.mxu0 0.0
    %110 = vmatprep.subr.mxu0 0.0
    %111 = vmatpush1.msra.mxu0 0.0
    %112 = vmatprep.subr.mxu0 0.0
    %113 = vmatpush1.msra.mxu0 0.0
    %114 = vmatprep.subr.mxu0 0.0
    %115 = vmatpush1.msra.mxu0 0.0
    %116 = vmatprep.subr.mxu0 0.0
    %117 = vmatpush1.msra.mxu0 0.0
    %118 = vmatprep.subr.mxu0 0.0
    %119 = vmatpush1.msra.mxu0 0.0
    %120 = vmatprep.subr.mxu0 0.0
    %121 = vmatpush1.msra.mxu0 0.0
    %122 = vmatprep.subr.mxu0 0.0
    %123 = vmatpush1.msra.mxu0 0.0
    %124 = vmatprep.subr.mxu0 0.0
    %125 = vmatpush1.msra.mxu0 0.0
    %126 = vmatprep.subr.mxu0 0.0
    %127 = vmatpush1.msra.mxu0 0.0
    %128 = vmatprep.mubr.f32.mxu0 0.0
    %129 = vmatmul.mubr.f32.gmra.mrb[0].mxu0 %v47
    %v130 = vpop.f32.mrb[0].mxu0
    %v131 = vadd.f32 0.0, %v130
    %v132 = vpop.f32.mrb[0].mxu0
    %133 = vdwg.mxu0
    %v134 = vadd.f32 %v46, %v131
    %135 = vst [vmem:[#allocation2] sm:$0xff] %v134
    // Predicated region
    $region26: #{tpu_custom_call.1} parent=1 // pred_check
      %p136 = pneg %p41
    $region27: #{tpu_custom_call.1} parent=1 // pred_check_branch
      %138 = sbr.rel (%p136) target = $region29
    $region28: #{tpu_custom_call.1} parent=1 // pred_region
      %v139 = vld [vmem:[#allocation2] sm:$0xff]
      %v140 = vld [vmem:[%s2] sm:$0x1]
      %v142 = vlaneseq
      %v143 = vshrl.u32 %v142, 7
      %v144 = vsub.s32 0, %v143
      %v145 = vrot.slane %v140, %v144
      %v147 = vadd.f32 %v139, %v145
      %148 = vst [vmem:[#allocation8] sm:$0xff] %v147
    $region29: #{tpu_custom_call.1} parent=1 // pred_fallthru
      _
    // Predicated region
    $region30: #{tpu_custom_call.1} parent=1 // pred_check
      _
    $region31: #{tpu_custom_call.1} parent=1 // pred_check_branch
      %150 = sbr.rel (0) target = $region33
    $region32: #{tpu_custom_call.1} parent=1 // pred_region
      %s152 = ssub.s32 128, 128
      %153 = vsyncadd [#allocation5], %s152
      %s155 = sshll.u32 [#allocation8], 4
      %s156 = int_to_ptr.vmem [resolvable:$true] %s155
      %158 = dma.vmem_to_hbm [thread:$0]  %s156, 128, %s3, [#allocation5]
    $region33: #{tpu_custom_call.1} parent=1 // pred_fallthru
      _
    // Predicated region
    $region34: #{tpu_custom_call.1} parent=1 // pred_check
      _
    $region35: #{tpu_custom_call.1} parent=1 // pred_check_branch
      %160 = sbr.rel (0) target = $region37
    $region36: #{tpu_custom_call.1} parent=1 // pred_region
      %161 = dma.done [#allocation5], 128
    $region37: #{tpu_custom_call.1} parent=1 // pred_fallthru
      _
    %162 = vsyncpa [#allocation4], 1
    %163 = vsyncpa [#allocation7], 1
    %164 = vsyncpa [#allocation5], 1

</llo_original>
